<compile_context>
chip_gen: v5e
topology: v5e:2x2
jax: 0.10.0
libtpu: 0.0.40
codegen_flags: <defaults>
</compile_context>

<pallas_src>
import jax
import jax.numpy as jnp
from jax.experimental import pallas as pl
from jax.experimental.pallas import tpu as pltpu

IN_FEATURES = 100
OUT_FEATURES = 100
PAD = 128        # lane-aligned feature width
SUBLANE = 8      # sublane alignment for f32


def fused_linear_kernel(x_ref, w_ref, b_ref, o_ref):
    # Single lane-dense (Bp,128) @ (128,128) matmul + bias add, fully resident in VMEM.
    o_ref[...] = (
        jnp.dot(x_ref[...], w_ref[...], preferred_element_type=jnp.float32)
        + b_ref[...]
    ).astype(o_ref.dtype)


def prepare_params(w1, b1, w2, b2):
    """One-time parameter prep: fuse the two linears, transpose to (in, out),
    and zero-pad feature dims to 128. Do NOT call this per forward pass."""
    w_fused = (2.0 * w1 + w2).T                      # (in=100, out=100)
    b_fused = 2.0 * b1 + b2                          # (100,)
    w_pad = jnp.zeros((PAD, PAD), w_fused.dtype).at[:IN_FEATURES, :OUT_FEATURES].set(w_fused)
    b_pad = jnp.zeros((1, PAD), b_fused.dtype).at[0, :OUT_FEATURES].set(b_fused)
    return w_pad, b_pad


@jax.jit
def simple_module_forward(x, w_pad, b_pad):
    """x: (B, 100) f32. w_pad: (128, 128) fused (in, out). b_pad: (1, 128)."""
    B = x.shape[0]
    Bp = ((B + SUBLANE - 1) // SUBLANE) * SUBLANE
    # Lane/sublane-pad the activations (cheap, fused by XLA around the custom call).
    x_pad = jnp.zeros((Bp, PAD), x.dtype).at[:B, :IN_FEATURES].set(x)

    vmem_spec = pl.BlockSpec(memory_space=pltpu.MemorySpace.VMEM)
    cost = pl.CostEstimate(
        flops=2 * Bp * PAD * PAD,
        transcendentals=0,
        bytes_accessed=(Bp * PAD + PAD * PAD + PAD + Bp * PAD) * 4,
    )
    out_pad = pl.pallas_call(
        fused_linear_kernel,
        out_shape=jax.ShapeDtypeStruct((Bp, PAD), x.dtype),
        in_specs=[vmem_spec, vmem_spec, vmem_spec],
        out_specs=vmem_spec,
        cost_estimate=cost,
    )(x_pad, w_pad, b_pad)
    # Slice back to the module's true output shape.
    return out_pad[:B, :OUT_FEATURES]


def reference_forward(x, w1, b1, w2, b2):
    y1 = x @ w1.T + b1
    y3 = x @ w2.T + b2
    return y1 + y1 + y3


if __name__ == "__main__":
    key = jax.random.PRNGKey(0)
    k_x, k_w1, k_b1, k_w2, k_b2 = jax.random.split(key, 5)

    B = 8
    # Deterministic parameter init (matches PyTorch Linear init scale: U(-1/sqrt(in), 1/sqrt(in))).
    bound = 1.0 / jnp.sqrt(jnp.float32(IN_FEATURES))
    w1 = jax.random.uniform(k_w1, (OUT_FEATURES, IN_FEATURES), jnp.float32, -bound, bound)
    b1 = jax.random.uniform(k_b1, (OUT_FEATURES,), jnp.float32, -bound, bound)
    w2 = jax.random.uniform(k_w2, (OUT_FEATURES, IN_FEATURES), jnp.float32, -bound, bound)
    b2 = jax.random.uniform(k_b2, (OUT_FEATURES,), jnp.float32, -bound, bound)

    x = jax.random.normal(k_x, (B, IN_FEATURES), jnp.float32)

    # One-time parameter preparation (fusion + transpose + padding), out of the hot path.
    w_pad, b_pad = prepare_params(w1, b1, w2, b2)
    w_pad, b_pad = jax.block_until_ready((w_pad, b_pad))

    out = simple_module_forward(x, w_pad, b_pad)
    out = jax.block_until_ready(out)

    ref = reference_forward(x, w1, b1, w2, b2)
    assert out.shape == (B, OUT_FEATURES)
    assert jnp.allclose(out, ref, atol=1e-4, rtol=1e-4), "mismatch vs reference"

    print("KERNEL_OK")
</pallas_src>

<mosaic_0001>
module attributes {stable_mosaic.version = 11 : i64} {
  func.func @fused_linear_kernel(%arg0: memref<8x128xf32, #tpu.memory_space<vmem>>, %arg1: memref<128x128xf32, #tpu.memory_space<vmem>>, %arg2: memref<1x128xf32, #tpu.memory_space<vmem>>, %arg3: memref<8x128xf32, #tpu.memory_space<vmem>>) attributes {dimension_semantics = [], scalar_prefetch = 0 : i64, scratch_operands = 0 : i64, tpu.core_type = #tpu.core_type<tc>} {
    %c0 = arith.constant 0 : index
    %c0_0 = arith.constant 0 : index
    %0 = vector.load %arg0[%c0, %c0_0] : memref<8x128xf32, #tpu.memory_space<vmem>>, vector<8x128xf32>
    %c0_1 = arith.constant 0 : index
    %c0_2 = arith.constant 0 : index
    %1 = vector.load %arg1[%c0_1, %c0_2] : memref<128x128xf32, #tpu.memory_space<vmem>>, vector<128x128xf32>
    %cst = arith.constant dense<0.000000e+00> : vector<8x128xf32>
    %2 = tpu.matmul %0, %1, %cst {dimension_numbers = #tpu.dot_dimension_numbers<[1], [0], [0], [1], [0, 0, 1, 1], [], []>} : vector<8x128xf32>, vector<128x128xf32>, vector<8x128xf32> -> vector<8x128xf32>
    %c0_3 = arith.constant 0 : index
    %c0_4 = arith.constant 0 : index
    %3 = vector.load %arg2[%c0_3, %c0_4] : memref<1x128xf32, #tpu.memory_space<vmem>>, vector<1x128xf32>
    %4 = vector.broadcast %3 : vector<1x128xf32> to vector<8x128xf32>
    %5 = arith.addf %2, %4 : vector<8x128xf32>
    %c0_5 = arith.constant 0 : index
    %c0_6 = arith.constant 0 : index
    %6 = vector.load %arg3[%c0_5, %c0_6] : memref<8x128xf32, #tpu.memory_space<vmem>>, vector<8x128xf32>
    tpu.vector_store %arg3[%c0_5, %c0_6], %5 {strides = array<i32>} : memref<8x128xf32, #tpu.memory_space<vmem>>, vector<8x128xf32>,
    return
  }
}

</mosaic_0001>

<llo_original>
// kernel: simple_module_forward.1
$region0: #{simple_module_forward.1}
  #allocation0 [shape = 'u32[]', space=smem, size = 0x4, offset = 0x4, fixed_abs, tag = 'smem constant byte address 0x4 - core index']
  #allocation1 [shape = 'u32[72,128]{1,0:T(1,128)}', space=vmem, size = 0x9000, scoped, tag = 'internal scratch']
  %s0 = inlined_call_operand.vmem [shape: f32[8,128], index: 0, kind: input, shape index: {}]
  %s1 = inlined_call_operand.hbm [shape: f32[128,128], index: 1, kind: input, shape index: {}]
  %s2 = inlined_call_operand.vmem [shape: f32[1,128], index: 2, kind: input, shape index: {}]
  %s3 = inlined_call_operand.hbm [shape: f32[8,128], index: 3, kind: output, shape index: {}]
  %s4 = sld [smem:[#allocation0]]
  $region26: #{simple_module_forward.1} parent=0
    _
  %s6 = ssub.s32 1, %s4
  %s7 = scalar_select 0, %s6, %s4
  $region1: #{simple_module_forward.1} parent=0
    #allocation2 [shape = 'u8[65536]{0}', space=vmem, size = 0x10000, scoped, tag = 'input window, operand 1, single buffered']
    #allocation3 [shape = 's32[1]{0}', space=sflag, size = 0x4, scoped, tag = 'scoped memory for simple_module_forward.1']
    #allocation4 [shape = 's32[1]{0}', space=sflag, size = 0x4, scoped, tag = 'scoped memory for simple_module_forward.1']
    #allocation5 [shape = 'u8[4096]{0}', space=vmem, size = 0x1000, scoped, tag = 'output window, operand 0, single buffered']
    %8 = vsyncpa [#allocation3], 0
    %9 = vsyncpa [#allocation4], 0
    // Predicated region
    $region2: #{simple_module_forward.1} parent=1 // pred_check
      _
    $region3: #{simple_module_forward.1} parent=1 // pred_check_branch
      %11 = sbr.rel (0) target = $region5
    $region4: #{simple_module_forward.1} parent=1 // pred_region
      _
    $region5: #{simple_module_forward.1} parent=1 // pred_fallthru
      _
    // Predicated region
    $region6: #{simple_module_forward.1} parent=1 // pred_check
      _
    $region7: #{simple_module_forward.1} parent=1 // pred_check_branch
      %13 = sbr.rel (0) target = $region9
    $region8: #{simple_module_forward.1} parent=1 // pred_region
      %15 = vsyncadd [#allocation3], 0
      %s16 = sshll.u32 %s1, 4
      %s17 = int_to_ptr.hbm [resolvable:$true] %s16
      %s18 = sshll.u32 [#allocation2], 4
      %s19 = int_to_ptr.vmem [resolvable:$true] %s18
      %24 = dma.hbm_to_vmem [thread:$0]  %s17, 2048, %s19, [#allocation3], 128, 128, 8
    $region9: #{simple_module_forward.1} parent=1 // pred_fallthru
      _
    // Predicated region
    $region10: #{simple_module_forward.1} parent=1 // pred_check
      _
    $region11: #{simple_module_forward.1} parent=1 // pred_check_branch
      %26 = sbr.rel (0) target = $region13
    $region12: #{simple_module_forward.1} parent=1 // pred_region
      _
    $region13: #{simple_module_forward.1} parent=1 // pred_fallthru
      _
    // Predicated region
    $region14: #{simple_module_forward.1} parent=1 // pred_check
      _
    $region15: #{simple_module_forward.1} parent=1 // pred_check_branch
      %28 = sbr.rel (0) target = $region17
    $region16: #{simple_module_forward.1} parent=1 // pred_region
      %30 = dma.done [#allocation3], 2048
    $region17: #{simple_module_forward.1} parent=1 // pred_fallthru
      _
    %v31 = vld [vmem:[%s0] sm:$0xff]
    %v32 = vld [vmem:[#allocation2] sm:$0xff]
    %v33 = vld [vmem:[#allocation2 + $0x8] sm:$0xff]
    %v34 = vld [vmem:[#allocation2 + $0x10] sm:$0xff]
    %v35 = vld [vmem:[#allocation2 + $0x18] sm:$0xff]
    %v36 = vld [vmem:[#allocation2 + $0x20] sm:$0xff]
    %v37 = vld [vmem:[#allocation2 + $0x28] sm:$0xff]
    %v38 = vld [vmem:[#allocation2 + $0x30] sm:$0xff]
    %v39 = vld [vmem:[#allocation2 + $0x38] sm:$0xff]
    %v40 = vld [vmem:[#allocation2 + $0x40] sm:$0xff]
    %v41 = vld [vmem:[#allocation2 + $0x48] sm:$0xff]
    %v42 = vld [vmem:[#allocation2 + $0x50] sm:$0xff]
    %v43 = vld [vmem:[#allocation2 + $0x58] sm:$0xff]
    %v44 = vld [vmem:[#allocation2 + $0x60] sm:$0xff]
    %v45 = vld [vmem:[#allocation2 + $0x68] sm:$0xff]
    %v46 = vld [vmem:[#allocation2 + $0x70] sm:$0xff]
    %v47 = vld [vmem:[#allocation2 + $0x78] sm:$0xff]
    %v48 = vld [vmem:[%s2] sm:$0x1]
    %v50 = vperm.slane %v48, 0
    %52 = vmatpush.msra.mxu0 %v47
    %53 = vmatpush.msra.mxu0 %v46
    %54 = vmatpush.msra.mxu0 %v45
    %55 = vmatpush.msra.mxu0 %v44
    %56 = vmatpush.msra.mxu0 %v43
    %57 = vmatpush.msra.mxu0 %v42
    %58 = vmatpush.msra.mxu0 %v41
    %59 = vmatpush.msra.mxu0 %v40
    %60 = vmatpush.msra.mxu0 %v39
    %61 = vmatpush.msra.mxu0 %v38
    %62 = vmatpush.msra.mxu0 %v37
    %63 = vmatpush.msra.mxu0 %v36
    %64 = vmatpush.msra.mxu0 %v35
    %65 = vmatpush.msra.mxu0 %v34
    %66 = vmatpush.msra.mxu0 %v33
    %67 = vmatpush.msra.mxu0 %v32
    %68 = vmatmul.f32.gmra.mxu0 %v31
    %v69 = vpop.f32.mrf.mxu0
    %v70 = vadd.f32 %v50, %v69
    %71 = vdwg.mxu0
    %72 = vst [vmem:[#allocation5] sm:$0xff] %v70
    // Predicated region
    $region18: #{simple_module_forward.1} parent=1 // pred_check
      _
    $region19: #{simple_module_forward.1} parent=1 // pred_check_branch
      %74 = sbr.rel (0) target = $region21
    $region20: #{simple_module_forward.1} parent=1 // pred_region
      %76 = vsyncadd [#allocation4], 0
      %s78 = sshll.u32 [#allocation5], 4
      %s79 = int_to_ptr.vmem [resolvable:$true] %s78
      %s80 = sshll.u32 %s3, 4
      %s81 = int_to_ptr.hbm [resolvable:$true] %s80
      %83 = dma.vmem_to_hbm [thread:$0]  %s79, 128, %s81, [#allocation4]
    $region21: #{simple_module_forward.1} parent=1 // pred_fallthru
      _
    // Predicated region
    $region22: #{simple_module_forward.1} parent=1 // pred_check
      _
    $region23: #{simple_module_forward.1} parent=1 // pred_check_branch
      %85 = sbr.rel (0) target = $region25
    $region24: #{simple_module_forward.1} parent=1 // pred_region
      %87 = dma.done [#allocation4], 128
    $region25: #{simple_module_forward.1} parent=1 // pred_fallthru
      _
    %88 = vsyncpa [#allocation3], 1
    %89 = vsyncpa [#allocation4], 1

</llo_original>
